<compile_context>
chip_gen: v7x
topology: tpu7x:2x2x1
jax: 0.10.0
libtpu: 0.0.40
codegen_flags: <defaults>
</compile_context>

<pallas_src>
import functools
from math import sqrt

import jax
import jax.numpy as jnp
from jax.experimental import pallas as pl
from jax.experimental.pallas import tpu as pltpu


def _round_up(x, m):
    return ((x + m - 1) // m) * m


def _reprogramming_attn_kernel(x_ref, ksum_ref, kmax_ref, kmin_ref, vw_ref,
                               o_ref, p_ref, *, scale, n_heads, s_pad, s_real):
    """Per-row-tile cross-attention with a fused (all-heads) output projection.

    x_ref    : (tile_m, 1)       f32  flattened (b*n, t) time-series values
    ksum_ref : (H, S_pad)        f32  ksum[h,s] = sum_e K[s,h,e] (0 in pad lanes)
    kmax_ref : (H,)              f32  SMEM, max_s ksum[h, :S]
    kmin_ref : (H,)              f32  SMEM, min_s ksum[h, :S]
    vw_ref   : (H*S_pad, tile_n) bf16 head-flattened V_h @ Wo_h (zero pad rows)
    o_ref    : (tile_m, tile_n)       output tile
    p_ref    : (tile_m, H*S_pad) bf16 VMEM scratch: all-head softmax probs
    """
    x = x_ref[...]
    x = jnp.where(jnp.isnan(x), jnp.float32(0.0), x)   # torch.where(nan_mask, 0., .)
    xs = x * jnp.float32(scale)                        # fold 1/sqrt(E) into scores
    nonneg = xs >= jnp.float32(0.0)                    # (tile_m, 1)

    if s_real < s_pad:
        lane = jax.lax.broadcasted_iota(jnp.int32, (1, s_pad), 1)
        pad_bias = jnp.where(lane < s_real, jnp.float32(0.0), jnp.float32(-1e30))
    else:
        pad_bias = None

    for h in range(n_heads):                           # static unroll over heads
        ksum_h = ksum_ref[pl.ds(h, 1), :]              # (1, S_pad)
        scores = xs * ksum_h                           # (tile_m, S_pad)
        # Row max of scores is a select on two precomputed scalars (no XLU max).
        m_h = xs * jnp.where(nonneg, kmax_ref[h], kmin_ref[h])   # (tile_m, 1)
        z = scores - m_h
        if pad_bias is not None:
            z = z + pad_bias                           # exp -> exactly 0 in pad lanes
        p = jnp.exp(z)
        l = jnp.sum(p, axis=-1, keepdims=True)         # (tile_m, 1)
        a = p * pl.reciprocal(l, approx=True)          # softmax; divide on the EUP
        # TODO(synk): attention dropout is identity here (eval mode).
        p_ref[:, pl.ds(h * s_pad, s_pad)] = a.astype(p_ref.dtype)

    # Single fused MXU dot over all heads: (tile_m, H*S_pad) @ (H*S_pad, tile_n).
    o_ref[...] = jnp.dot(p_ref[...], vw_ref[...],
                         preferred_element_type=jnp.float32).astype(o_ref.dtype)


@functools.partial(jax.jit,
                   static_argnames=("n_heads", "tile_m", "tile_n", "out_dtype"))
def reprogramming_layer(time_series, source_embedding, value_embedding,
                        wk, bk, wv, bv, wo, *, n_heads,
                        tile_m=512, tile_n=512, out_dtype=None):
    """Forward pass of ReprogrammingLayer.

    time_series      : (B, T, N)
    source_embedding : (S, d_llm)
    value_embedding  : (S, d_llm)
    wk, wv           : (d_llm, H*E)  (== torch Linear weight.T);  bk, bv: (H*E,)
    wo               : (H*E, d_llm)  (== torch Linear weight.T, no bias)
    returns          : (B*N, T, d_llm)

    tile_m: rows per grid step (multiple of 16).  512 default; raise to
            1024-2048 on v5e/v6e for large B*N*T, keep 256-512 on v7x.
    tile_n: d_llm columns per grid step (multiple of 128); keeps the VMEM
            footprint independent of d_llm for LLaMA-scale models.
    out_dtype: kernel output dtype (default: time_series dtype); pass bf16 if
            the consumer allows it to halve HBM writeback.
    """
    f32 = jnp.float32
    B, T, N = time_series.shape
    S, d_llm = source_embedding.shape
    H = int(n_heads)
    HE = wk.shape[1]
    E = HE // H
    scale = 1.0 / sqrt(E)
    out_dt = time_series.dtype if out_dtype is None else out_dtype

    # ---- one-shot K/V preprocessing (plain XLA; runs once, per perf review) ----
    k_full = source_embedding.astype(f32) @ wk.astype(f32) + bk.astype(f32)  # (S, H*E)
    v_full = value_embedding.astype(f32) @ wv.astype(f32) + bv.astype(f32)   # (S, H*E)
    ksum = k_full.reshape(S, H, E).sum(axis=-1).T          # (H, S)
    kmax = jnp.max(ksum, axis=1)                           # (H,)
    kmin = jnp.min(ksum, axis=1)                           # (H,)
    vw = jnp.einsum('she,hed->hsd', v_full.reshape(S, H, E),
                    wo.reshape(H, E, d_llm).astype(f32))   # (H, S, d_llm)

    # ---- pad S to a lane multiple and d_llm to the column tile -------------------
    s_pad = _round_up(S, 128)
    tn = _round_up(min(tile_n, _round_up(d_llm, 128)), 128)
    d_pad = _round_up(d_llm, tn)
    ksum_p = jnp.pad(ksum, ((0, 0), (0, s_pad - S)))                        # (H, s_pad)
    vw_flat = jnp.pad(vw, ((0, 0), (0, s_pad - S), (0, d_pad - d_llm)))
    vw_flat = vw_flat.reshape(H * s_pad, d_pad).astype(jnp.bfloat16)        # (H*s_pad, d_pad)

    # ---- flatten + pad the row axis ----------------------------------------------
    M = B * N * T
    tm = _round_up(min(tile_m, _round_up(M, 16)), 16)
    m_pad = _round_up(M, tm)
    x = jnp.transpose(time_series, (0, 2, 1)).reshape(M, 1).astype(f32)
    x = jnp.pad(x, ((0, m_pad - M), (0, 0)))

    # ---- VMEM budget: 1x vw block + 1x ksum + p scratch + 2x (x, out) tiles ------
    vmem_bytes = (H * s_pad * tn * 2 + H * s_pad * 4 + tm * H * s_pad * 2
                  + 2 * tm * 4 + 2 * tm * tn * jnp.dtype(out_dt).itemsize)
    vmem_limit = int(min(max(1.5 * vmem_bytes + (4 << 20), 32 << 20), 128 << 20))

    kernel = functools.partial(_reprogramming_attn_kernel, scale=scale,
                               n_heads=H, s_pad=s_pad, s_real=S)
    grid = (d_pad // tn, m_pad // tm)   # d_llm tiles outer -> vw stays resident over rows
    y = pl.pallas_call(
        kernel,
        out_shape=jax.ShapeDtypeStruct((m_pad, d_pad), out_dt),
        grid=grid,
        in_specs=[
            pl.BlockSpec((tm, 1), lambda j, i: (i, 0)),
            pl.BlockSpec((H, s_pad), lambda j, i: (0, 0),
                         pipeline_mode=pl.Buffered(1)),      # grid-invariant, single buffer
            pl.BlockSpec(memory_space=pltpu.MemorySpace.SMEM),
            pl.BlockSpec(memory_space=pltpu.MemorySpace.SMEM),
            pl.BlockSpec((H * s_pad, tn), lambda j, i: (0, j),
                         pipeline_mode=pl.Buffered(1)),      # changes only with outer j
        ],
        out_specs=pl.BlockSpec((tm, tn), lambda j, i: (i, j)),
        scratch_shapes=[pltpu.VMEM((tm, H * s_pad), jnp.bfloat16)],
        compiler_params=pltpu.CompilerParams(
            dimension_semantics=("parallel", "parallel"),
            vmem_limit_bytes=vmem_limit),
    )(x, ksum_p, kmax, kmin, vw_flat)

    # TODO(synk): output dropout is identity here (eval mode).
    return y[:M, :d_llm].reshape(B * N, T, d_llm)


if __name__ == "__main__":
    # Small shapes consistent with the module:
    #   B=2 batches, T=8 time steps, N=4 variables, S=16 source prototypes,
    #   d_llm=128 (LLM hidden, lane-dense), n_heads=4, d_keys=8.
    B, T, N = 2, 8, 4
    S, d_llm = 16, 128
    n_heads, d_keys = 4, 8
    HE = n_heads * d_keys

    key = jax.random.PRNGKey(0)
    ks = jax.random.split(key, 8)
    time_series = jax.random.normal(ks[0], (B, T, N), dtype=jnp.float32)
    # A few NaNs to exercise the nan -> 0 masking of Q.
    time_series = time_series.at[0, 1, 2].set(jnp.nan)
    time_series = time_series.at[1, 5, 0].set(jnp.nan)

    source_embedding = jax.random.normal(ks[1], (S, d_llm), dtype=jnp.float32)
    value_embedding = jax.random.normal(ks[2], (S, d_llm), dtype=jnp.float32)

    # Linear params in (in_features, out_features) layout (== torch weight.T).
    wk = jax.random.normal(ks[3], (d_llm, HE), dtype=jnp.float32) / jnp.sqrt(d_llm)
    bk = jax.random.normal(ks[4], (HE,), dtype=jnp.float32) * 0.1
    wv = jax.random.normal(ks[5], (d_llm, HE), dtype=jnp.float32) / jnp.sqrt(d_llm)
    bv = jax.random.normal(ks[6], (HE,), dtype=jnp.float32) * 0.1
    wo = jax.random.normal(ks[7], (HE, d_llm), dtype=jnp.float32) / jnp.sqrt(HE)

    # tile_m=32 so the small demo still exercises a multi-step (grid row=2) pipeline.
    out = reprogramming_layer(time_series, source_embedding, value_embedding,
                              wk, bk, wv, bv, wo, n_heads=n_heads, tile_m=32)
    out = jax.block_until_ready(out)

    # Pure-JAX reference following the torch op order exactly (f32 everywhere).
    x2d = jnp.transpose(time_series, (0, 2, 1)).reshape(B * N, T)
    xq = jnp.nan_to_num(x2d, nan=0.0)
    Q = jnp.broadcast_to(xq[:, :, None, None], (B * N, T, n_heads, d_keys))
    K = (source_embedding @ wk + bk).reshape(S, n_heads, d_keys)
    V = (value_embedding @ wv + bv).reshape(S, n_heads, d_keys)
    scores = jnp.einsum('bthe,she->bhts', Q, K)
    A = jax.nn.softmax(scores / jnp.sqrt(jnp.float32(d_keys)), axis=-1)
    rep = jnp.einsum('bhts,she->bthe', A, V)
    ref = rep.reshape(B * N, T, HE) @ wo

    assert out.shape == (B * N, T, d_llm)
    # bf16 probabilities / bf16 (V@Wo) slab / approx reciprocal in the kernel
    # -> loosened tolerance vs the f32 reference (per the perf-review note).
    err = float(jnp.max(jnp.abs(out - ref)))
    assert jnp.allclose(out, ref, atol=5e-2, rtol=5e-2), err

    print("KERNEL_OK")
</pallas_src>

<mosaic_0001>
module attributes {stable_mosaic.version = 11 : i64} {
  func.func @_reprogramming_attn_kernel(%arg0: i32, %arg1: i32, %arg2: memref<32x1xf32, #tpu.memory_space<vmem>>, %arg3: memref<4x128xf32, #tpu.memory_space<vmem>>, %arg4: memref<4xf32, #tpu.memory_space<smem>>, %arg5: memref<4xf32, #tpu.memory_space<smem>>, %arg6: memref<512x128xbf16, #tpu.memory_space<vmem>>, %arg7: memref<32x128xf32, #tpu.memory_space<vmem>>, %arg8: memref<32x512xbf16, #tpu.memory_space<vmem>>) attributes {dimension_semantics = [#tpu.dimension_semantics<parallel>, #tpu.dimension_semantics<parallel>], iteration_bounds = array<i64: 1, 2>, scalar_prefetch = 0 : i64, scratch_operands = 1 : i64, tpu.core_type = #tpu.core_type<tc>, window_params = [{transform_indices = @transform_0, window_bounds = array<i64: 32, 1>}, {pipeline_mode = #tpu.pipeline_mode<synchronous>, transform_indices = @transform_1, window_bounds = array<i64: 4, 128>}, {transform_indices = @transform_2, window_bounds = array<i64: 4>}, {transform_indices = @transform_3, window_bounds = array<i64: 4>}, {pipeline_mode = #tpu.pipeline_mode<synchronous>, transform_indices = @transform_4, window_bounds = array<i64: 512, 128>}, {transform_indices = @transform_5, window_bounds = array<i64: 32, 128>}]} {
    %c0 = arith.constant 0 : index
    %c0_0 = arith.constant 0 : index
    %0 = vector.load %arg2[%c0, %c0_0] : memref<32x1xf32, #tpu.memory_space<vmem>>, vector<32x1xf32>
    %1 = arith.cmpf one, %0, %0 : vector<32x1xf32>
    %cst = arith.constant 0.000000e+00 : f32
    %2 = vector.broadcast %cst : f32 to vector<32x1xf32>
    %3 = arith.select %1, %2, %0 : vector<32x1xi1>, vector<32x1xf32>
    %cst_1 = arith.constant 0.353553385 : f32
    %4 = vector.broadcast %cst_1 : f32 to vector<32x1xf32>
    %5 = arith.mulf %3, %4 : vector<32x1xf32>
    %cst_2 = arith.constant 0.000000e+00 : f32
    %6 = vector.broadcast %cst_2 : f32 to vector<32x1xf32>
    %7 = arith.cmpf oge, %5, %6 : vector<32x1xf32>
    %8 = tpu.iota {dimensions = array<i32: 1>} : vector<1x128xi32>
    %c16_i32 = arith.constant 16 : i32
    %9 = vector.broadcast %c16_i32 : i32 to vector<1x128xi32>
    %10 = arith.cmpi slt, %8, %9 : vector<1x128xi32>
    %cst_3 = arith.constant 0.000000e+00 : f32
    %cst_4 = arith.constant -1.000000e+30 : f32
    %11 = vector.broadcast %cst_3 : f32 to vector<1x128xf32>
    %12 = vector.broadcast %cst_4 : f32 to vector<1x128xf32>
    %13 = arith.select %10, %11, %12 : vector<1x128xi1>, vector<1x128xf32>
    %c0_5 = arith.constant 0 : index
    %c0_6 = arith.constant 0 : index
    %14 = vector.load %arg3[%c0_5, %c0_6] : memref<4x128xf32, #tpu.memory_space<vmem>>, vector<1x128xf32>
    %15 = vector.broadcast %5 : vector<32x1xf32> to vector<32x128xf32>
    %16 = vector.broadcast %14 : vector<1x128xf32> to vector<32x128xf32>
    %17 = arith.mulf %15, %16 : vector<32x128xf32>
    %c0_7 = arith.constant 0 : index
    %18 = memref.load %arg4[%c0_7] : memref<4xf32, #tpu.memory_space<smem>>
    %c0_8 = arith.constant 0 : index
    %19 = memref.load %arg5[%c0_8] : memref<4xf32, #tpu.memory_space<smem>>
    %20 = vector.broadcast %18 : f32 to vector<32x1xf32>
    %21 = vector.broadcast %19 : f32 to vector<32x1xf32>
    %22 = arith.select %7, %20, %21 : vector<32x1xi1>, vector<32x1xf32>
    %23 = arith.mulf %5, %22 : vector<32x1xf32>
    %24 = vector.broadcast %23 : vector<32x1xf32> to vector<32x128xf32>
    %25 = arith.subf %17, %24 : vector<32x128xf32>
    %26 = vector.broadcast %13 : vector<1x128xf32> to vector<32x128xf32>
    %27 = arith.addf %25, %26 : vector<32x128xf32>
    %28 = math.exp %27 : vector<32x128xf32>
    %cst_9 = arith.constant dense<0.000000e+00> : vector<32xf32>
    %29 = vector.multi_reduction <add>, %28, %cst_9 [1] : vector<32x128xf32> to vector<32xf32>
    %30 = vector.shape_cast %29 : vector<32xf32> to vector<32x1xf32>
    %31 = tpu.reciprocal %30 {approx = true} : vector<32x1xf32> -> vector<32x1xf32>
    %32 = vector.broadcast %31 : vector<32x1xf32> to vector<32x128xf32>
    %33 = arith.mulf %28, %32 : vector<32x128xf32>
    %34 = arith.truncf %33 : vector<32x128xf32> to vector<32x128xbf16>
    %c0_10 = arith.constant 0 : index
    %c0_11 = arith.constant 0 : index
    %35 = vector.load %arg8[%c0_10, %c0_11] : memref<32x512xbf16, #tpu.memory_space<vmem>>, vector<32x128xbf16>
    tpu.vector_store %arg8[%c0_10, %c0_11], %34 {strides = array<i32>} : memref<32x512xbf16, #tpu.memory_space<vmem>>, vector<32x128xbf16>,
    %c1 = arith.constant 1 : index
    %c0_12 = arith.constant 0 : index
    %36 = vector.load %arg3[%c1, %c0_12] : memref<4x128xf32, #tpu.memory_space<vmem>>, vector<1x128xf32>
    %37 = vector.broadcast %5 : vector<32x1xf32> to vector<32x128xf32>
    %38 = vector.broadcast %36 : vector<1x128xf32> to vector<32x128xf32>
    %39 = arith.mulf %37, %38 : vector<32x128xf32>
    %c1_13 = arith.constant 1 : index
    %40 = memref.load %arg4[%c1_13] : memref<4xf32, #tpu.memory_space<smem>>
    %c1_14 = arith.constant 1 : index
    %41 = memref.load %arg5[%c1_14] : memref<4xf32, #tpu.memory_space<smem>>
    %42 = vector.broadcast %40 : f32 to vector<32x1xf32>
    %43 = vector.broadcast %41 : f32 to vector<32x1xf32>
    %44 = arith.select %7, %42, %43 : vector<32x1xi1>, vector<32x1xf32>
    %45 = arith.mulf %5, %44 : vector<32x1xf32>
    %46 = vector.broadcast %45 : vector<32x1xf32> to vector<32x128xf32>
    %47 = arith.subf %39, %46 : vector<32x128xf32>
    %48 = vector.broadcast %13 : vector<1x128xf32> to vector<32x128xf32>
    %49 = arith.addf %47, %48 : vector<32x128xf32>
    %50 = math.exp %49 : vector<32x128xf32>
    %cst_15 = arith.constant dense<0.000000e+00> : vector<32xf32>
    %51 = vector.multi_reduction <add>, %50, %cst_15 [1] : vector<32x128xf32> to vector<32xf32>
    %52 = vector.shape_cast %51 : vector<32xf32> to vector<32x1xf32>
    %53 = tpu.reciprocal %52 {approx = true} : vector<32x1xf32> -> vector<32x1xf32>
    %54 = vector.broadcast %53 : vector<32x1xf32> to vector<32x128xf32>
    %55 = arith.mulf %50, %54 : vector<32x128xf32>
    %56 = arith.truncf %55 : vector<32x128xf32> to vector<32x128xbf16>
    %c0_16 = arith.constant 0 : index
    %c128 = arith.constant 128 : index
    %57 = vector.load %arg8[%c0_16, %c128] : memref<32x512xbf16, #tpu.memory_space<vmem>>, vector<32x128xbf16>
    tpu.vector_store %arg8[%c0_16, %c128], %56 {strides = array<i32>} : memref<32x512xbf16, #tpu.memory_space<vmem>>, vector<32x128xbf16>,
    %c2 = arith.constant 2 : index
    %c0_17 = arith.constant 0 : index
    %58 = vector.load %arg3[%c2, %c0_17] : memref<4x128xf32, #tpu.memory_space<vmem>>, vector<1x128xf32>
    %59 = vector.broadcast %5 : vector<32x1xf32> to vector<32x128xf32>
    %60 = vector.broadcast %58 : vector<1x128xf32> to vector<32x128xf32>
    %61 = arith.mulf %59, %60 : vector<32x128xf32>
    %c2_18 = arith.constant 2 : index
    %62 = memref.load %arg4[%c2_18] : memref<4xf32, #tpu.memory_space<smem>>
    %c2_19 = arith.constant 2 : index
    %63 = memref.load %arg5[%c2_19] : memref<4xf32, #tpu.memory_space<smem>>
    %64 = vector.broadcast %62 : f32 to vector<32x1xf32>
    %65 = vector.broadcast %63 : f32 to vector<32x1xf32>
    %66 = arith.select %7, %64, %65 : vector<32x1xi1>, vector<32x1xf32>
    %67 = arith.mulf %5, %66 : vector<32x1xf32>
    %68 = vector.broadcast %67 : vector<32x1xf32> to vector<32x128xf32>
    %69 = arith.subf %61, %68 : vector<32x128xf32>
    %70 = vector.broadcast %13 : vector<1x128xf32> to vector<32x128xf32>
    %71 = arith.addf %69, %70 : vector<32x128xf32>
    %72 = math.exp %71 : vector<32x128xf32>
    %cst_20 = arith.constant dense<0.000000e+00> : vector<32xf32>
    %73 = vector.multi_reduction <add>, %72, %cst_20 [1] : vector<32x128xf32> to vector<32xf32>
    %74 = vector.shape_cast %73 : vector<32xf32> to vector<32x1xf32>
    %75 = tpu.reciprocal %74 {approx = true} : vector<32x1xf32> -> vector<32x1xf32>
    %76 = vector.broadcast %75 : vector<32x1xf32> to vector<32x128xf32>
    %77 = arith.mulf %72, %76 : vector<32x128xf32>
    %78 = arith.truncf %77 : vector<32x128xf32> to vector<32x128xbf16>
    %c0_21 = arith.constant 0 : index
    %c256 = arith.constant 256 : index
    %79 = vector.load %arg8[%c0_21, %c256] : memref<32x512xbf16, #tpu.memory_space<vmem>>, vector<32x128xbf16>
    tpu.vector_store %arg8[%c0_21, %c256], %78 {strides = array<i32>} : memref<32x512xbf16, #tpu.memory_space<vmem>>, vector<32x128xbf16>,
    %c3 = arith.constant 3 : index
    %c0_22 = arith.constant 0 : index
    %80 = vector.load %arg3[%c3, %c0_22] : memref<4x128xf32, #tpu.memory_space<vmem>>, vector<1x128xf32>
    %81 = vector.broadcast %5 : vector<32x1xf32> to vector<32x128xf32>
    %82 = vector.broadcast %80 : vector<1x128xf32> to vector<32x128xf32>
    %83 = arith.mulf %81, %82 : vector<32x128xf32>
    %c3_23 = arith.constant 3 : index
    %84 = memref.load %arg4[%c3_23] : memref<4xf32, #tpu.memory_space<smem>>
    %c3_24 = arith.constant 3 : index
    %85 = memref.load %arg5[%c3_24] : memref<4xf32, #tpu.memory_space<smem>>
    %86 = vector.broadcast %84 : f32 to vector<32x1xf32>
    %87 = vector.broadcast %85 : f32 to vector<32x1xf32>
    %88 = arith.select %7, %86, %87 : vector<32x1xi1>, vector<32x1xf32>
    %89 = arith.mulf %5, %88 : vector<32x1xf32>
    %90 = vector.broadcast %89 : vector<32x1xf32> to vector<32x128xf32>
    %91 = arith.subf %83, %90 : vector<32x128xf32>
    %92 = vector.broadcast %13 : vector<1x128xf32> to vector<32x128xf32>
    %93 = arith.addf %91, %92 : vector<32x128xf32>
    %94 = math.exp %93 : vector<32x128xf32>
    %cst_25 = arith.constant dense<0.000000e+00> : vector<32xf32>
    %95 = vector.multi_reduction <add>, %94, %cst_25 [1] : vector<32x128xf32> to vector<32xf32>
    %96 = vector.shape_cast %95 : vector<32xf32> to vector<32x1xf32>
    %97 = tpu.reciprocal %96 {approx = true} : vector<32x1xf32> -> vector<32x1xf32>
    %98 = vector.broadcast %97 : vector<32x1xf32> to vector<32x128xf32>
    %99 = arith.mulf %94, %98 : vector<32x128xf32>
    %100 = arith.truncf %99 : vector<32x128xf32> to vector<32x128xbf16>
    %c0_26 = arith.constant 0 : index
    %c384 = arith.constant 384 : index
    %101 = vector.load %arg8[%c0_26, %c384] : memref<32x512xbf16, #tpu.memory_space<vmem>>, vector<32x128xbf16>
    tpu.vector_store %arg8[%c0_26, %c384], %100 {strides = array<i32>} : memref<32x512xbf16, #tpu.memory_space<vmem>>, vector<32x128xbf16>,
    %c0_27 = arith.constant 0 : index
    %c0_28 = arith.constant 0 : index
    %102 = vector.load %arg8[%c0_27, %c0_28] : memref<32x512xbf16, #tpu.memory_space<vmem>>, vector<32x512xbf16>
    %c0_29 = arith.constant 0 : index
    %c0_30 = arith.constant 0 : index
    %103 = vector.load %arg6[%c0_29, %c0_30] : memref<512x128xbf16, #tpu.memory_space<vmem>>, vector<512x128xbf16>
    %cst_31 = arith.constant dense<0.000000e+00> : vector<32x128xf32>
    %104 = tpu.matmul %102, %103, %cst_31 {dimension_numbers = #tpu.dot_dimension_numbers<[1], [0], [0], [1], [0, 0, 1, 1], [], []>} : vector<32x512xbf16>, vector<512x128xbf16>, vector<32x128xf32> -> vector<32x128xf32>
    %c0_32 = arith.constant 0 : index
    %c0_33 = arith.constant 0 : index
    %105 = vector.load %arg7[%c0_32, %c0_33] : memref<32x128xf32, #tpu.memory_space<vmem>>, vector<32x128xf32>
    tpu.vector_store %arg7[%c0_32, %c0_33], %104 {strides = array<i32>} : memref<32x128xf32, #tpu.memory_space<vmem>>, vector<32x128xf32>,
    return
  }
  func.func @transform_0(%arg0: i32, %arg1: i32) -> (i32, i32) {
    %c0_i32 = arith.constant 0 : i32
    %c0_i32_0 = arith.constant 0 : i32
    return %arg1, %c0_i32 : i32, i32
  }
  func.func @transform_1(%arg0: i32, %arg1: i32) -> (i32, i32) {
    %c0_i32 = arith.constant 0 : i32
    %c0_i32_0 = arith.constant 0 : i32
    %c0_i32_1 = arith.constant 0 : i32
    return %c0_i32, %c0_i32_0 : i32, i32
  }
  func.func @transform_2(%arg0: i32, %arg1: i32) -> i32 {
    %c0_i32 = arith.constant 0 : i32
    %c0_i32_0 = arith.constant 0 : i32
    return %c0_i32 : i32
  }
  func.func @transform_3(%arg0: i32, %arg1: i32) -> i32 {
    %c0_i32 = arith.constant 0 : i32
    %c0_i32_0 = arith.constant 0 : i32
    return %c0_i32 : i32
  }
  func.func @transform_4(%arg0: i32, %arg1: i32) -> (i32, i32) {
    %c0_i32 = arith.constant 0 : i32
    %c0_i32_0 = arith.constant 0 : i32
    return %c0_i32, %arg0 : i32, i32
  }
  func.func @transform_5(%arg0: i32, %arg1: i32) -> (i32, i32) {
    %c0_i32 = arith.constant 0 : i32
    return %arg1, %arg0 : i32, i32
  }
}

</mosaic_0001>

<llo_original>
// kernel: reprogramming_layer.1
$region0: #{reprogramming_layer.1}
  #allocation0 [shape = 'u32[]', space=smem, size = 0x4, offset = 0x4, fixed_abs, tag = 'smem constant byte address 0x4 - core index']
  #allocation1 [shape = 'u32[144,128]{1,0:T(1,128)}', space=vmem, size = 0x12000, scoped, tag = 'internal scratch']
  #allocation2 [shape = 'bf16[32,512]{1,0:T(16,128)(2,1)}', space=vmem, size = 0x8000, scoped, tag = 'scratch operand']
  %s0 = inlined_call_operand.vmem [shape: f32[64,1], index: 0, kind: input, shape index: {}]
  %s1 = inlined_call_operand.vmem [shape: f32[4,128], index: 1, kind: input, shape index: {}]
  %s2 = inlined_call_operand.vmem [shape: f32[4], index: 2, kind: input, shape index: {}]
  %s3 = inlined_call_operand.vmem [shape: f32[4], index: 3, kind: input, shape index: {}]
  %s4 = inlined_call_operand.vmem [shape: bf16[512,128], index: 4, kind: input, shape index: {}]
  %s5 = inlined_call_operand.hbm [shape: f32[64,128], index: 5, kind: output, shape index: {}]
  %s6 = sld [smem:[#allocation0]]
  $region61: #{reprogramming_layer.1} parent=0
    _
  %s8 = ssub.s32 1, %s6
  %s9 = scalar_select 0, %s8, %s6
  $region1: #{reprogramming_layer.1} parent=0
    #allocation3 [shape = 'u8[512]{0}', space=smem, size = 0x200, scoped, tag = 'input window, operand 2, single buffered']
    #allocation4 [shape = 's32[2]{0}', space=sflag, size = 0x8, scoped, tag = 'scoped memory for reprogramming_layer.1']
    #allocation5 [shape = 's32[2]{0}', space=sflag, size = 0x8, scoped, tag = 'scoped memory for reprogramming_layer.1']
    #allocation6 [shape = 'u8[512]{0}', space=smem, size = 0x200, scoped, tag = 'input window, operand 3, single buffered']
    #allocation7 [shape = 's32[1]{0}', space=sflag, size = 0x4, scoped, tag = 'scoped memory for reprogramming_layer.1']
    #allocation8 [shape = 'u8[32768]{0}', space=vmem, size = 0x8000, scoped, tag = 'output window, operand 0']
    %10 = vsyncpa [#allocation5], 0
    %11 = vsyncpa [#allocation7], 0
    %12 = vsyncpa [#allocation4], 0
    %s13 = scalar_lea.sflag [#allocation4], 1
    %14 = vsyncpa %s13, 0
    loop: start=0, step=1, limit=4
    $region2: #{reprogramming_layer.1} parent=1 // loop_pre_header
      _
    $region3: #{reprogramming_layer.1} parent=1 // loop_header
      %s16 = sphi 0, %s20
      %p17 = scmp.ge.s32.totalorder %s16, 4
      %s23 = sphi 0, %s35
      %s24 = sphi 0, %s31
      %s25 = sphi 0, %s23
      %s26 = sphi 0, %s24
      %s27 = sphi 0, %s25
      %s28 = sphi 0, %s26
      %s38 = sphi 0, %s40
      %s41 = sphi 0, %s38
      %s42 = sphi 0, %s41
      %s58 = sphi 0, %s42
      %s62 = sphi 0, %s62
      %s64 = sphi 0, %s62
      %s65 = sphi 0, %s64
      %s79 = sphi 0, %s65
      %s83 = sphi 0, %s83
      %s85 = sphi 0, %s83
      %s86 = sphi 0, %s85
      %s100 = sphi 0, %s86
      %s104 = sphi 0, %s104
      %s106 = sphi 0, %s104
      %s107 = sphi 0, %s106
      %s121 = sphi 0, %s107
      %s127 = sphi 0, %s129
      %s130 = sphi 0, %s127
      %s131 = sphi 0, %s130
      %s147 = sphi 0, %s131
      %s155 = sphi 0, %s157
      %s158 = sphi 0, %s155
      %s159 = sphi 0, %s158
      %s175 = sphi 0, %s159
    $region4: #{reprogramming_layer.1} parent=1 // loop_header_branch
      %19 = sbr.rel (%p17) target = $region8
    $region5: #{reprogramming_layer.1} parent=1 // loop_body
      %s21 = ssub.s32 %s16, 1
      %s22 = ssub.s32 %s16, 2
      %s29 = sadd.s32 1, %s24
      %p30 = scmp.ge.s32.totalorder %s29, 2
      %s31 = scalar_select %p30, 0, %s29
      %s32 = sadd.s32 1, %s23
      %s33 = scalar_select %p30, %s32, %s23
      %p34 = scmp.ge.s32.totalorder %s33, 1
      %s35 = scalar_select %p34, 0, %s33
      %s36 = ssub.s32 %s24, %s31
      %p37 = scmp.eq.s32.totalorder %s36, 0
      %s39 = sadd.s32 %s38, 1
      %s40 = scalar_select %p37, %s38, %s39
      %p43 = pneg %p37
      %p44 = scmp.eq.s32.totalorder %s16, 1
      %p45 = por %p43, %p44
      %p46 = scmp.ne.s32.totalorder %s38, %s41
      %p47 = scmp.eq.s32.totalorder %s16, 0
      %p48 = por %p46, %p47
      %p49 = scmp.ne.s32.totalorder %s38, %s41
      %p50 = scmp.eq.s32.totalorder %s21, 1
      %p51 = por %p49, %p50
      %p52 = scmp.ne.s32.totalorder %s41, %s42
      %p53 = scmp.eq.s32.totalorder %s21, 0
      %p54 = por %p52, %p53
      %p55 = scmp.ne.s32.totalorder %s41, %s42
      %p56 = scmp.eq.s32.totalorder %s22, 1
      %p57 = por %p55, %p56
      %p59 = scmp.ne.s32.totalorder %s42, %s58
      %p60 = scmp.eq.s32.totalorder %s22, 0
      %p61 = por %p59, %p60
      %s63 = sadd.s32 %s62, 1
      %p66 = scmp.eq.s32.totalorder %s16, 1
      %p67 = scmp.ne.s32.totalorder %s62, %s64
      %p68 = scmp.eq.s32.totalorder %s16, 0
      %p69 = por %p67, %p68
      %p70 = scmp.ne.s32.totalorder %s62, %s64
      %p71 = scmp.eq.s32.totalorder %s21, 1
      %p72 = por %p70, %p71
      %p73 = scmp.ne.s32.totalorder %s64, %s65
      %p74 = scmp.eq.s32.totalorder %s21, 0
      %p75 = por %p73, %p74
      %p76 = scmp.ne.s32.totalorder %s64, %s65
      %p77 = scmp.eq.s32.totalorder %s22, 1
      %p78 = por %p76, %p77
      %p80 = scmp.ne.s32.totalorder %s65, %s79
      %p81 = scmp.eq.s32.totalorder %s22, 0
      %p82 = por %p80, %p81
      %s84 = sadd.s32 %s83, 1
      %p87 = scmp.eq.s32.totalorder %s16, 1
      %p88 = scmp.ne.s32.totalorder %s83, %s85
      %p89 = scmp.eq.s32.totalorder %s16, 0
      %p90 = por %p88, %p89
      %p91 = scmp.ne.s32.totalorder %s83, %s85
      %p92 = scmp.eq.s32.totalorder %s21, 1
      %p93 = por %p91, %p92
      %p94 = scmp.ne.s32.totalorder %s85, %s86
      %p95 = scmp.eq.s32.totalorder %s21, 0
      %p96 = por %p94, %p95
      %p97 = scmp.ne.s32.totalorder %s85, %s86
      %p98 = scmp.eq.s32.totalorder %s22, 1
      %p99 = por %p97, %p98
      %p101 = scmp.ne.s32.totalorder %s86, %s100
      %p102 = scmp.eq.s32.totalorder %s22, 0
      %p103 = por %p101, %p102
      %s105 = sadd.s32 %s104, 1
      %p108 = scmp.eq.s32.totalorder %s16, 1
      %p109 = scmp.ne.s32.totalorder %s104, %s106
      %p110 = scmp.eq.s32.totalorder %s16, 0
      %p111 = por %p109, %p110
      %p112 = scmp.ne.s32.totalorder %s104, %s106
      %p113 = scmp.eq.s32.totalorder %s21, 1
      %p114 = por %p112, %p113
      %p115 = scmp.ne.s32.totalorder %s106, %s107
      %p116 = scmp.eq.s32.totalorder %s21, 0
      %p117 = por %p115, %p116
      %p118 = scmp.ne.s32.totalorder %s106, %s107
      %p119 = scmp.eq.s32.totalorder %s22, 1
      %p120 = por %p118, %p119
      %p122 = scmp.ne.s32.totalorder %s107, %s121
      %p123 = scmp.eq.s32.totalorder %s22, 0
      %p124 = por %p122, %p123
      %s125 = ssub.s32 %s23, %s35
      %p126 = scmp.eq.s32.totalorder %s125, 0
      %s128 = sadd.s32 %s127, 1
      %s129 = scalar_select %p126, %s127, %s128
      %p132 = pneg %p126
      %p133 = scmp.eq.s32.totalorder %s16, 1
      %p134 = por %p132, %p133
      %p135 = scmp.ne.s32.totalorder %s127, %s130
      %p136 = scmp.eq.s32.totalorder %s16, 0
      %p137 = por %p135, %p136
      %p138 = scmp.ne.s32.totalorder %s127, %s130
      %p139 = scmp.eq.s32.totalorder %s21, 1
      %p140 = por %p138, %p139
      %p141 = scmp.ne.s32.totalorder %s130, %s131
      %p142 = scmp.eq.s32.totalorder %s21, 0
      %p143 = por %p141, %p142
      %p144 = scmp.ne.s32.totalorder %s130, %s131
      %p145 = scmp.eq.s32.totalorder %s22, 1
      %p146 = por %p144, %p145
      %p148 = scmp.ne.s32.totalorder %s131, %s147
      %p149 = scmp.eq.s32.totalorder %s22, 0
      %p150 = por %p148, %p149
      %s151 = ssub.s32 %s24, %s31
      %s152 = ssub.s32 %s23, %s35
      %s153 = sor.u32 %s151, %s152
      %p154 = scmp.eq.s32.totalorder %s153, 0
      %s156 = sadd.s32 %s155, 1
      %s157 = scalar_select %p154, %s155, %s156
      %p160 = pneg %p154
      %p161 = scmp.eq.s32.totalorder %s16, 1
      %p162 = por %p160, %p161
      %p163 = scmp.ne.s32.totalorder %s155, %s158
      %p164 = scmp.eq.s32.totalorder %s16, 0
      %p165 = por %p163, %p164
      %p166 = scmp.ne.s32.totalorder %s155, %s158
      %p167 = scmp.eq.s32.totalorder %s21, 1
      %p168 = por %p166, %p167
      %p169 = scmp.ne.s32.totalorder %s158, %s159
      %p170 = scmp.eq.s32.totalorder %s21, 0
      %p171 = por %p169, %p170
      %p172 = scmp.ne.s32.totalorder %s158, %s159
      %p173 = scmp.eq.s32.totalorder %s22, 1
      %p174 = por %p172, %p173
      %p176 = scmp.ne.s32.totalorder %s159, %s175
      %p177 = scmp.eq.s32.totalorder %s22, 0
      %p178 = por %p176, %p177
      %p179 = scmp.le.s32.totalorder 1, %s16
      %p180 = scmp.lt.s32.totalorder %s16, 3
      %p181 = pnand %p179, %p180
      %p182 = pneg %p181
      // Predicated region
      $region9: #{reprogramming_layer.1} parent=5 // pred_check
        _
      $region10: #{reprogramming_layer.1} parent=5 // pred_check_branch
        %184 = sbr.rel (%p181) target = $region12
      $region11: #{reprogramming_layer.1} parent=5 // pred_region
        %s185 = ssub.s32 %s16, 1
        // Predicated region
        $region13: #{reprogramming_layer.1} parent=11 // pred_check
          %p186 = pneg %p75
        $region14: #{reprogramming_layer.1} parent=11 // pred_check_branch
          %188 = sbr.rel (%p186) target = $region16
        $region15: #{reprogramming_layer.1} parent=11 // pred_region
          _
        $region16: #{reprogramming_layer.1} parent=11 // pred_fallthru
          _
        // Predicated region
        $region17: #{reprogramming_layer.1} parent=11 // pred_check
          %p189 = pneg %p96
        $region18: #{reprogramming_layer.1} parent=11 // pred_check_branch
          %191 = sbr.rel (%p189) target = $region20
        $region19: #{reprogramming_layer.1} parent=11 // pred_region
          %s193 = ssub.s32 16, 16
          %194 = vsyncadd [#allocation5], %s193
          %s196 = sshll.u32 %s2, 4
          %s197 = int_to_ptr.vmem [resolvable:$true] %s196
          %199 = dma.vmem_to_smem %s197, 16, [#allocation3], [#allocation5]
        $region20: #{reprogramming_layer.1} parent=11 // pred_fallthru
          _
        // Predicated region
        $region21: #{reprogramming_layer.1} parent=11 // pred_check
          %p200 = pneg %p117
        $region22: #{reprogramming_layer.1} parent=11 // pred_check_branch
          %202 = sbr.rel (%p200) target = $region24
        $region23: #{reprogramming_layer.1} parent=11 // pred_region
          %s204 = ssub.s32 16, 16
          %205 = vsyncadd [#allocation7], %s204
          %s207 = sshll.u32 %s3, 4
          %s208 = int_to_ptr.vmem [resolvable:$true] %s207
          %210 = dma.vmem_to_smem %s208, 16, [#allocation6], [#allocation7]
        $region24: #{reprogramming_layer.1} parent=11 // pred_fallthru
          _
        // Predicated region
        $region25: #{reprogramming_layer.1} parent=11 // pred_check
          %p211 = pneg %p143
        $region26: #{reprogramming_layer.1} parent=11 // pred_check_branch
          %213 = sbr.rel (%p211) target = $region28
        $region27: #{reprogramming_layer.1} parent=11 // pred_region
          %p214 = scmp.lt.s32.totalorder %s25, 0
          %s215 = scalar_select %p214, %s25, 0
          %s216 = smul.addr %s215, 4
          %s217 = scalar_lea.vmem %s4, %s216
        $region28: #{reprogramming_layer.1} parent=11 // pred_fallthru
          _
      $region12: #{reprogramming_layer.1} parent=5 // pred_fallthru
        _
      %p218 = scmp.lt.s32.totalorder %s16, 2
      // Predicated region
      $region29: #{reprogramming_layer.1} parent=5 // pred_check
        %p219 = pneg %p218
      $region30: #{reprogramming_layer.1} parent=5 // pred_check_branch
        %221 = sbr.rel (%p219) target = $region32
      $region31: #{reprogramming_layer.1} parent=5 // pred_region
        // Predicated region
        $region33: #{reprogramming_layer.1} parent=31 // pred_check
          %p222 = pneg %p48
        $region34: #{reprogramming_layer.1} parent=31 // pred_check_branch
          %224 = sbr.rel (%p222) target = $region36
        $region35: #{reprogramming_layer.1} parent=31 // pred_region
          %s225 = smul.u32 4, %s24
          %p226 = scmp.lt.s32.totalorder %s225, 7
          %s227 = scalar_select %p226, %s225, 7
          %s228 = smul.addr %s227, 8
          %s229 = scalar_lea.vmem %s0, %s228
          %s230 = smul.u32 4, %s24
        $region36: #{reprogramming_layer.1} parent=31 // pred_fallthru
          _
      $region32: #{reprogramming_layer.1} parent=5 // pred_fallthru
        _
      %p231 = scmp.le.s32.totalorder 1, %s16
      %p232 = scmp.lt.s32.totalorder %s16, 3
      %p233 = pnand %p231, %p232
      %p234 = pneg %p233
      // Predicated region
      $region37: #{reprogramming_layer.1} parent=5 // pred_check
        _
      $region38: #{reprogramming_layer.1} parent=5 // pred_check_branch
        %236 = sbr.rel (%p233) target = $region40
      $region39: #{reprogramming_layer.1} parent=5 // pred_region
        %s237 = ssub.s32 %s16, 1
        // Predicated region
        $region41: #{reprogramming_layer.1} parent=39 // pred_check
          %p238 = pneg %p96
        $region42: #{reprogramming_layer.1} parent=39 // pred_check_branch
          %240 = sbr.rel (%p238) target = $region44
        $region43: #{reprogramming_layer.1} parent=39 // pred_region
          %241 = dma.done [#allocation5], 16
        $region44: #{reprogramming_layer.1} parent=39 // pred_fallthru
          _
        // Predicated region
        $region45: #{reprogramming_layer.1} parent=39 // pred_check
          %p242 = pneg %p117
        $region46: #{reprogramming_layer.1} parent=39 // pred_check_branch
          %244 = sbr.rel (%p242) target = $region48
        $region47: #{reprogramming_layer.1} parent=39 // pred_region
          %245 = dma.done [#allocation7], 16
        $region48: #{reprogramming_layer.1} parent=39 // pred_fallthru
          _
        %246 = sfence
        %s247 = smul.u32 4, %s26
        %p248 = scmp.lt.s32.totalorder %s247, 7
        %s249 = scalar_select %p248, %s247, 7
        %s250 = smul.addr %s249, 8
        %s251 = scalar_lea.vmem %s0, %s250
        %p252 = pneg %p54
        %p253 = pneg %p51
        %p254 = pneg %p75
        %p255 = pneg %p72
        %p256 = pneg %p96
        %p257 = pneg %p93
        %p258 = pneg %p117
        %p259 = pneg %p114
        %p260 = scmp.lt.s32.totalorder %s25, 0
        %s261 = scalar_select %p260, %s25, 0
        %s262 = smul.addr %s261, 4
        %s263 = scalar_lea.vmem %s4, %s262
        %p264 = pneg %p143
        %p265 = pneg %p140
        %p266 = pneg %p171
        %p267 = pneg %p168
        %s268 = sand.u32 %s158, 1
        %s269 = scalar_lea.sflag [#allocation4], %s268
        %s270 = sand.u32 %s158, 1
        %s271 = smul.addr %s270, 32
        %s272 = scalar_lea.vmem [#allocation8], %s271
        %s273 = smul.u32 4, %s26
        %p274 = scmp.lt.s32.totalorder %s273, 7
        %s275 = scalar_select %p274, %s273, 7
        %s276 = smul.addr %s275, 8
        %s277 = scalar_lea.vmem %s0, %s276
        %s278 = smul.u32 4, %s26
        %p279 = scmp.lt.s32.totalorder %s25, 0
        %s280 = scalar_select %p279, %s25, 0
        %s281 = smul.addr %s280, 4
        %s282 = scalar_lea.vmem %s4, %s281
        %s283 = smul.u32 4, %s26
        %v285 = vld [vmem:[%s277] sm:$0xff]
        %v286 = vld [vmem:[%s277 + $0x8] sm:$0xff]
        %v287 = vld [vmem:[%s277 + $0x10] sm:$0xff]
        %v288 = vld [vmem:[%s277 + $0x18] sm:$0xff]
        %vm289 = vcmp.ne.f32.partialorder %v285, %v285
        %vm290 = vcmp.ne.f32.partialorder %v286, %v286
        %vm291 = vcmp.ne.f32.partialorder %v287, %v287
        %vm292 = vcmp.ne.f32.partialorder %v288, %v288
        %v293 = vsel %vm289, 0.0, %v285
        %v294 = vsel %vm290, 0.0, %v286
        %v295 = vsel %vm291, 0.0, %v287
        %v296 = vsel %vm292, 0.0, %v288
        %v297 = vmul.f32 %v293, 0.35355338
        %v298 = vmul.f32 %v294, 0.35355338
        %v299 = vmul.f32 %v295, 0.35355338
        %v300 = vmul.f32 %v296, 0.35355338
        %vm301 = vcmp.ge.f32.partialorder %v297, 0.0
        %vm302 = vcmp.ge.f32.partialorder %v298, 0.0
        %vm303 = vcmp.ge.f32.partialorder %v299, 0.0
        %vm304 = vcmp.ge.f32.partialorder %v300, 0.0
        %v305 = vlaneseq
        %v306 = vand.u32 %v305, 127
        %vm307 = vcmp.lt.s32.totalorder %v306, 16
        %v308 = vsel %vm307, 0.0, -1e+30
        %v309 = vld [vmem:[%s1] sm:$0x1]
        %311 = vset.pattern.permute.xlu0 0
        %312 = vperm.xlu0 %311, %v297
        %v313 = vpop.permute.xlu0 %312
        %316 = vset.pattern.permute.xlu0 0
        %317 = vperm.xlu0 %316, %v298
        %v318 = vpop.permute.xlu0 %317
        %321 = vset.pattern.permute.xlu0 0
        %322 = vperm.xlu0 %321, %v299
        %v323 = vpop.permute.xlu0 %322
        %326 = vset.pattern.permute.xlu0 0
        %327 = vperm.xlu0 %326, %v300
        %v328 = vpop.permute.xlu0 %327
        %v330 = vlaneseq
        %v331 = vshrl.u32 %v330, 7
        %v332 = vsub.s32 0, %v331
        %v333 = vrot.slane %v309, %v332
        %v334 = vmul.f32 %v313, %v333
        %v335 = vmul.f32 %v318, %v333
        %v336 = vmul.f32 %v323, %v333
        %v337 = vmul.f32 %v328, %v333
        %s338 = sld [smem:[#allocation3]]
        %s339 = sld [smem:[#allocation6]]
        %v340 = vstv %s338
        %v341 = vstv %s339
        %v342 = vsel %vm301, %v340, %v341
        %v343 = vsel %vm302, %v340, %v341
        %v344 = vsel %vm303, %v340, %v341
        %v345 = vsel %vm304, %v340, %v341
        %v346 = vmul.f32 %v297, %v342
        %v347 = vmul.f32 %v298, %v343
        %v348 = vmul.f32 %v299, %v344
        %v349 = vmul.f32 %v300, %v345
        %351 = vset.pattern.permute.xlu0 0
        %352 = vperm.xlu0 %351, %v346
        %v353 = vpop.permute.xlu0 %352
        %356 = vset.pattern.permute.xlu0 0
        %357 = vperm.xlu0 %356, %v347
        %v358 = vpop.permute.xlu0 %357
        %361 = vset.pattern.permute.xlu0 0
        %362 = vperm.xlu0 %361, %v348
        %v363 = vpop.permute.xlu0 %362
        %366 = vset.pattern.permute.xlu0 0
        %367 = vperm.xlu0 %366, %v349
        %v368 = vpop.permute.xlu0 %367
        %v370 = vsub.f32 %v334, %v353
        %v371 = vsub.f32 %v335, %v358
        %v372 = vsub.f32 %v336, %v363
        %v373 = vsub.f32 %v337, %v368
        %v374 = vadd.f32 %v370, %v308
        %v375 = vadd.f32 %v371, %v308
        %v376 = vadd.f32 %v372, %v308
        %v377 = vadd.f32 %v373, %v308
        %v378 = vmul.f32 %v374, 1.442695
        %v379 = vpow.pop %v378
        %v380 = vmul.f32 %v375, 1.442695
        %v381 = vpow.pop %v380
        %v382 = vmul.f32 %v376, 1.442695
        %v383 = vpow.pop %v382
        %v384 = vmul.f32 %v377, 1.442695
        %v385 = vpow.pop %v384
        %386 = vadd.xlane.f32.xlu0 %v379
        %v387 = vpop.xlane.xlu0 %386
        %388 = vadd.xlane.f32.xlu0 %v381
        %v389 = vpop.xlane.xlu0 %388
        %390 = vadd.xlane.f32.xlu0 %v383
        %v391 = vpop.xlane.xlu0 %390
        %392 = vadd.xlane.f32.xlu0 %v385
        %v393 = vpop.xlane.xlu0 %392
        %v394 = vrcp.pop %v387
        %v395 = vrcp.pop %v389
        %v396 = vrcp.pop %v391
        %v397 = vrcp.pop %v393
        %v398 = vmul.f32 %v379, %v394
        %v399 = vmul.f32 %v381, %v395
        %v400 = vmul.f32 %v383, %v396
        %v401 = vmul.f32 %v385, %v397
        %v402 = vpack.c.bf16 %v399, %v398
        %v403 = vpack.c.bf16 %v401, %v400
        %404 = vst [vmem:[#allocation2] sm:$0xff] %v402
        %405 = vst [vmem:[#allocation2 + $0x20] sm:$0xff] %v403
        %v406 = vld [vmem:[%s1 + $0x1] sm:$0x1]
        %v407 = vlaneseq
        %v408 = vshrl.u32 %v407, 7
        %v409 = vsub.s32 0, %v408
        %v410 = vrot.slane %v406, %v409
        %v411 = vmul.f32 %v313, %v410
        %v412 = vmul.f32 %v318, %v410
        %v413 = vmul.f32 %v323, %v410
        %v414 = vmul.f32 %v328, %v410
        %s415 = sld [smem:[#allocation3 + $0x1]]
        %s416 = sld [smem:[#allocation6 + $0x1]]
        %v417 = vstv %s415
        %v418 = vstv %s416
        %v419 = vsel %vm301, %v417, %v418
        %v420 = vsel %vm302, %v417, %v418
        %v421 = vsel %vm303, %v417, %v418
        %v422 = vsel %vm304, %v417, %v418
        %v423 = vmul.f32 %v297, %v419
        %v424 = vmul.f32 %v298, %v420
        %v425 = vmul.f32 %v299, %v421
        %v426 = vmul.f32 %v300, %v422
        %428 = vset.pattern.permute.xlu0 0
        %429 = vperm.xlu0 %428, %v423
        %v430 = vpop.permute.xlu0 %429
        %433 = vset.pattern.permute.xlu0 0
        %434 = vperm.xlu0 %433, %v424
        %v435 = vpop.permute.xlu0 %434
        %438 = vset.pattern.permute.xlu0 0
        %439 = vperm.xlu0 %438, %v425
        %v440 = vpop.permute.xlu0 %439
        %443 = vset.pattern.permute.xlu0 0
        %444 = vperm.xlu0 %443, %v426
        %v445 = vpop.permute.xlu0 %444
        %v447 = vsub.f32 %v411, %v430
        %v448 = vsub.f32 %v412, %v435
        %v449 = vsub.f32 %v413, %v440
        %v450 = vsub.f32 %v414, %v445
        %v451 = vadd.f32 %v447, %v308
        %v452 = vadd.f32 %v448, %v308
        %v453 = vadd.f32 %v449, %v308
        %v454 = vadd.f32 %v450, %v308
        %v455 = vmul.f32 %v451, 1.442695
        %v456 = vpow.pop %v455
        %v457 = vmul.f32 %v452, 1.442695
        %v458 = vpow.pop %v457
        %v459 = vmul.f32 %v453, 1.442695
        %v460 = vpow.pop %v459
        %v461 = vmul.f32 %v454, 1.442695
        %v462 = vpow.pop %v461
        %463 = vadd.xlane.f32.xlu0 %v456
        %v464 = vpop.xlane.xlu0 %463
        %465 = vadd.xlane.f32.xlu0 %v458
        %v466 = vpop.xlane.xlu0 %465
        %467 = vadd.xlane.f32.xlu0 %v460
        %v468 = vpop.xlane.xlu0 %467
        %469 = vadd.xlane.f32.xlu0 %v462
        %v470 = vpop.xlane.xlu0 %469
        %v471 = vrcp.pop %v464
        %v472 = vrcp.pop %v466
        %v473 = vrcp.pop %v468
        %v474 = vrcp.pop %v470
        %v475 = vmul.f32 %v456, %v471
        %v476 = vmul.f32 %v458, %v472
        %v477 = vmul.f32 %v460, %v473
        %v478 = vmul.f32 %v462, %v474
        %v479 = vpack.c.bf16 %v476, %v475
        %v480 = vpack.c.bf16 %v478, %v477
        %481 = vst [vmem:[#allocation2 + $0x8] sm:$0xff] %v479
        %482 = vst [vmem:[#allocation2 + $0x28] sm:$0xff] %v480
        %v483 = vld [vmem:[%s1 + $0x2] sm:$0x1]
        %v484 = vlaneseq
        %v485 = vshrl.u32 %v484, 7
        %v486 = vsub.s32 0, %v485
        %v487 = vrot.slane %v483, %v486
        %v488 = vmul.f32 %v313, %v487
        %v489 = vmul.f32 %v318, %v487
        %v490 = vmul.f32 %v323, %v487
        %v491 = vmul.f32 %v328, %v487
        %s492 = sld [smem:[#allocation3 + $0x2]]
        %s493 = sld [smem:[#allocation6 + $0x2]]
        %v494 = vstv %s492
        %v495 = vstv %s493
        %v496 = vsel %vm301, %v494, %v495
        %v497 = vsel %vm302, %v494, %v495
        %v498 = vsel %vm303, %v494, %v495
        %v499 = vsel %vm304, %v494, %v495
        %v500 = vmul.f32 %v297, %v496
        %v501 = vmul.f32 %v298, %v497
        %v502 = vmul.f32 %v299, %v498
        %v503 = vmul.f32 %v300, %v499
        %505 = vset.pattern.permute.xlu0 0
        %506 = vperm.xlu0 %505, %v500
        %v507 = vpop.permute.xlu0 %506
        %510 = vset.pattern.permute.xlu0 0
        %511 = vperm.xlu0 %510, %v501
        %v512 = vpop.permute.xlu0 %511
        %515 = vset.pattern.permute.xlu0 0
        %516 = vperm.xlu0 %515, %v502
        %v517 = vpop.permute.xlu0 %516
        %520 = vset.pattern.permute.xlu0 0
        %521 = vperm.xlu0 %520, %v503
        %v522 = vpop.permute.xlu0 %521
        %v524 = vsub.f32 %v488, %v507
        %v525 = vsub.f32 %v489, %v512
        %v526 = vsub.f32 %v490, %v517
        %v527 = vsub.f32 %v491, %v522
        %v528 = vadd.f32 %v524, %v308
        %v529 = vadd.f32 %v525, %v308
        %v530 = vadd.f32 %v526, %v308
        %v531 = vadd.f32 %v527, %v308
        %v532 = vmul.f32 %v528, 1.442695
        %v533 = vpow.pop %v532
        %v534 = vmul.f32 %v529, 1.442695
        %v535 = vpow.pop %v534
        %v536 = vmul.f32 %v530, 1.442695
        %v537 = vpow.pop %v536
        %v538 = vmul.f32 %v531, 1.442695
        %v539 = vpow.pop %v538
        %540 = vadd.xlane.f32.xlu0 %v533
        %v541 = vpop.xlane.xlu0 %540
        %542 = vadd.xlane.f32.xlu0 %v535
        %v543 = vpop.xlane.xlu0 %542
        %544 = vadd.xlane.f32.xlu0 %v537
        %v545 = vpop.xlane.xlu0 %544
        %546 = vadd.xlane.f32.xlu0 %v539
        %v547 = vpop.xlane.xlu0 %546
        %v548 = vrcp.pop %v541
        %v549 = vrcp.pop %v543
        %v550 = vrcp.pop %v545
        %v551 = vrcp.pop %v547
        %v552 = vmul.f32 %v533, %v548
        %v553 = vmul.f32 %v535, %v549
        %v554 = vmul.f32 %v537, %v550
        %v555 = vmul.f32 %v539, %v551
        %v556 = vpack.c.bf16 %v553, %v552
        %v557 = vpack.c.bf16 %v555, %v554
        %558 = vst [vmem:[#allocation2 + $0x10] sm:$0xff] %v556
        %559 = vst [vmem:[#allocation2 + $0x30] sm:$0xff] %v557
        %v560 = vld [vmem:[%s1 + $0x3] sm:$0x1]
        %v561 = vlaneseq
        %v562 = vshrl.u32 %v561, 7
        %v563 = vsub.s32 0, %v562
        %v564 = vrot.slane %v560, %v563
        %v565 = vmul.f32 %v313, %v564
        %v566 = vmul.f32 %v318, %v564
        %v567 = vmul.f32 %v323, %v564
        %v568 = vmul.f32 %v328, %v564
        %s569 = sld [smem:[#allocation3 + $0x3]]
        %s570 = sld [smem:[#allocation6 + $0x3]]
        %v571 = vstv %s569
        %v572 = vstv %s570
        %v573 = vsel %vm301, %v571, %v572
        %v574 = vsel %vm302, %v571, %v572
        %v575 = vsel %vm303, %v571, %v572
        %v576 = vsel %vm304, %v571, %v572
        %v577 = vmul.f32 %v297, %v573
        %v578 = vmul.f32 %v298, %v574
        %v579 = vmul.f32 %v299, %v575
        %v580 = vmul.f32 %v300, %v576
        %582 = vset.pattern.permute.xlu0 0
        %583 = vperm.xlu0 %582, %v577
        %v584 = vpop.permute.xlu0 %583
        %587 = vset.pattern.permute.xlu0 0
        %588 = vperm.xlu0 %587, %v578
        %v589 = vpop.permute.xlu0 %588
        %592 = vset.pattern.permute.xlu0 0
        %593 = vperm.xlu0 %592, %v579
        %v594 = vpop.permute.xlu0 %593
        %597 = vset.pattern.permute.xlu0 0
        %598 = vperm.xlu0 %597, %v580
        %v599 = vpop.permute.xlu0 %598
        %v601 = vsub.f32 %v565, %v584
        %v602 = vsub.f32 %v566, %v589
        %v603 = vsub.f32 %v567, %v594
        %v604 = vsub.f32 %v568, %v599
        %v605 = vadd.f32 %v601, %v308
        %v606 = vadd.f32 %v602, %v308
        %v607 = vadd.f32 %v603, %v308
        %v608 = vadd.f32 %v604, %v308
        %v609 = vmul.f32 %v605, 1.442695
        %v610 = vpow.pop %v609
        %v611 = vmul.f32 %v606, 1.442695
        %v612 = vpow.pop %v611
        %v613 = vmul.f32 %v607, 1.442695
        %v614 = vpow.pop %v613
        %v615 = vmul.f32 %v608, 1.442695
        %v616 = vpow.pop %v615
        %617 = vadd.xlane.f32.xlu0 %v610
        %v618 = vpop.xlane.xlu0 %617
        %619 = vadd.xlane.f32.xlu0 %v612
        %v620 = vpop.xlane.xlu0 %619
        %621 = vadd.xlane.f32.xlu0 %v614
        %v622 = vpop.xlane.xlu0 %621
        %623 = vadd.xlane.f32.xlu0 %v616
        %v624 = vpop.xlane.xlu0 %623
        %v625 = vrcp.pop %v618
        %v626 = vrcp.pop %v620
        %v627 = vrcp.pop %v622
        %v628 = vrcp.pop %v624
        %v629 = vmul.f32 %v610, %v625
        %v630 = vmul.f32 %v612, %v626
        %v631 = vmul.f32 %v614, %v627
        %v632 = vmul.f32 %v616, %v628
        %v633 = vpack.c.bf16 %v630, %v629
        %v634 = vpack.c.bf16 %v632, %v631
        %635 = vst [vmem:[#allocation2 + $0x18] sm:$0xff] %v633
        %636 = vst [vmem:[#allocation2 + $0x38] sm:$0xff] %v634
        %v637 = vld [vmem:[#allocation2] sm:$0xff]
        %v638 = vld [vmem:[#allocation2 + $0x8] sm:$0xff]
        %v639 = vld [vmem:[#allocation2 + $0x10] sm:$0xff]
        %v640 = vld [vmem:[#allocation2 + $0x18] sm:$0xff]
        %v641 = vld [vmem:[#allocation2 + $0x20] sm:$0xff]
        %v642 = vld [vmem:[#allocation2 + $0x28] sm:$0xff]
        %v643 = vld [vmem:[#allocation2 + $0x30] sm:$0xff]
        %v644 = vld [vmem:[#allocation2 + $0x38] sm:$0xff]
        %v645 = vld [vmem:[%s282] sm:$0xf]
        %v646 = vld [vmem:[%s282 + $0x4] sm:$0xf]
        %v647 = vld [vmem:[%s282 + $0x8] sm:$0xf]
        %v648 = vld [vmem:[%s282 + $0xc] sm:$0xf]
        %v649 = vld [vmem:[%s282 + $0x10] sm:$0xf]
        %v650 = vld [vmem:[%s282 + $0x14] sm:$0xf]
        %v651 = vld [vmem:[%s282 + $0x18] sm:$0xf]
        %v652 = vld [vmem:[%s282 + $0x1c] sm:$0xf]
        %v653 = vld [vmem:[%s282 + $0x20] sm:$0xf]
        %v654 = vld [vmem:[%s282 + $0x24] sm:$0xf]
        %v655 = vld [vmem:[%s282 + $0x28] sm:$0xf]
        %v656 = vld [vmem:[%s282 + $0x2c] sm:$0xf]
        %v657 = vld [vmem:[%s282 + $0x30] sm:$0xf]
        %v658 = vld [vmem:[%s282 + $0x34] sm:$0xf]
        %v659 = vld [vmem:[%s282 + $0x38] sm:$0xf]
        %v660 = vld [vmem:[%s282 + $0x3c] sm:$0xf]
        %v661 = vld [vmem:[%s282 + $0x40] sm:$0xf]
        %v662 = vld [vmem:[%s282 + $0x44] sm:$0xf]
        %v663 = vld [vmem:[%s282 + $0x48] sm:$0xf]
        %v664 = vld [vmem:[%s282 + $0x4c] sm:$0xf]
        %v665 = vld [vmem:[%s282 + $0x50] sm:$0xf]
        %v666 = vld [vmem:[%s282 + $0x54] sm:$0xf]
        %v667 = vld [vmem:[%s282 + $0x58] sm:$0xf]
        %v668 = vld [vmem:[%s282 + $0x5c] sm:$0xf]
        %v669 = vld [vmem:[%s282 + $0x60] sm:$0xf]
        %v670 = vld [vmem:[%s282 + $0x64] sm:$0xf]
        %v671 = vld [vmem:[%s282 + $0x68] sm:$0xf]
        %v672 = vld [vmem:[%s282 + $0x6c] sm:$0xf]
        %v673 = vld [vmem:[%s282 + $0x70] sm:$0xf]
        %v674 = vld [vmem:[%s282 + $0x74] sm:$0xf]
        %v675 = vld [vmem:[%s282 + $0x78] sm:$0xf]
        %v676 = vld [vmem:[%s282 + $0x7c] sm:$0xf]
        %v677 = vld [vmem:[%s282 + $0x80] sm:$0xf]
        %v678 = vld [vmem:[%s282 + $0x84] sm:$0xf]
        %v679 = vld [vmem:[%s282 + $0x88] sm:$0xf]
        %v680 = vld [vmem:[%s282 + $0x8c] sm:$0xf]
        %v681 = vld [vmem:[%s282 + $0x90] sm:$0xf]
        %v682 = vld [vmem:[%s282 + $0x94] sm:$0xf]
        %v683 = vld [vmem:[%s282 + $0x98] sm:$0xf]
        %v684 = vld [vmem:[%s282 + $0x9c] sm:$0xf]
        %v685 = vld [vmem:[%s282 + $0xa0] sm:$0xf]
        %v686 = vld [vmem:[%s282 + $0xa4] sm:$0xf]
        %v687 = vld [vmem:[%s282 + $0xa8] sm:$0xf]
        %v688 = vld [vmem:[%s282 + $0xac] sm:$0xf]
        %v689 = vld [vmem:[%s282 + $0xb0] sm:$0xf]
        %v690 = vld [vmem:[%s282 + $0xb4] sm:$0xf]
        %v691 = vld [vmem:[%s282 + $0xb8] sm:$0xf]
        %v692 = vld [vmem:[%s282 + $0xbc] sm:$0xf]
        %v693 = vld [vmem:[%s282 + $0xc0] sm:$0xf]
        %v694 = vld [vmem:[%s282 + $0xc4] sm:$0xf]
        %v695 = vld [vmem:[%s282 + $0xc8] sm:$0xf]
        %v696 = vld [vmem:[%s282 + $0xcc] sm:$0xf]
        %v697 = vld [vmem:[%s282 + $0xd0] sm:$0xf]
        %v698 = vld [vmem:[%s282 + $0xd4] sm:$0xf]
        %v699 = vld [vmem:[%s282 + $0xd8] sm:$0xf]
        %v700 = vld [vmem:[%s282 + $0xdc] sm:$0xf]
        %v701 = vld [vmem:[%s282 + $0xe0] sm:$0xf]
        %v702 = vld [vmem:[%s282 + $0xe4] sm:$0xf]
        %v703 = vld [vmem:[%s282 + $0xe8] sm:$0xf]
        %v704 = vld [vmem:[%s282 + $0xec] sm:$0xf]
        %v705 = vld [vmem:[%s282 + $0xf0] sm:$0xf]
        %v706 = vld [vmem:[%s282 + $0xf4] sm:$0xf]
        %v707 = vld [vmem:[%s282 + $0xf8] sm:$0xf]
        %v708 = vld [vmem:[%s282 + $0xfc] sm:$0xf]
        %v773 = vunpack.c.l.b16 %v645
        %v774 = vunpack.c.l.b16 %v646
        %v775 = vunpack.c.l.b16 %v647
        %v776 = vunpack.c.l.b16 %v648
        %v777 = vunpack.c.l.b16 %v649
        %v778 = vunpack.c.l.b16 %v650
        %v779 = vunpack.c.l.b16 %v651
        %v780 = vunpack.c.l.b16 %v652
        %v781 = vunpack.c.l.b16 %v653
        %v782 = vunpack.c.l.b16 %v654
        %v783 = vunpack.c.l.b16 %v655
        %v784 = vunpack.c.l.b16 %v656
        %v785 = vunpack.c.l.b16 %v657
        %v786 = vunpack.c.l.b16 %v658
        %v787 = vunpack.c.l.b16 %v659
        %v788 = vunpack.c.l.b16 %v660
        %v789 = vunpack.c.l.b16 %v661
        %v790 = vunpack.c.l.b16 %v662
        %v791 = vunpack.c.l.b16 %v663
        %v792 = vunpack.c.l.b16 %v664
        %v793 = vunpack.c.l.b16 %v665
        %v794 = vunpack.c.l.b16 %v666
        %v795 = vunpack.c.l.b16 %v667
        %v796 = vunpack.c.l.b16 %v668
        %v797 = vunpack.c.l.b16 %v669
        %v798 = vunpack.c.l.b16 %v670
        %v799 = vunpack.c.l.b16 %v671
        %v800 = vunpack.c.l.b16 %v672
        %v801 = vunpack.c.l.b16 %v673
        %v802 = vunpack.c.l.b16 %v674
        %v803 = vunpack.c.l.b16 %v675
        %v804 = vunpack.c.l.b16 %v676
        %v805 = vunpack.c.l.b16 %v677
        %v806 = vunpack.c.l.b16 %v678
        %v807 = vunpack.c.l.b16 %v679
        %v808 = vunpack.c.l.b16 %v680
        %v809 = vunpack.c.l.b16 %v681
        %v810 = vunpack.c.l.b16 %v682
        %v811 = vunpack.c.l.b16 %v683
        %v812 = vunpack.c.l.b16 %v684
        %v813 = vunpack.c.l.b16 %v685
        %v814 = vunpack.c.l.b16 %v686
        %v815 = vunpack.c.l.b16 %v687
        %v816 = vunpack.c.l.b16 %v688
        %v817 = vunpack.c.l.b16 %v689
        %v818 = vunpack.c.l.b16 %v690
        %v819 = vunpack.c.l.b16 %v691
        %v820 = vunpack.c.l.b16 %v692
        %v821 = vunpack.c.l.b16 %v693
        %v822 = vunpack.c.l.b16 %v694
        %v823 = vunpack.c.l.b16 %v695
        %v824 = vunpack.c.l.b16 %v696
        %v825 = vunpack.c.l.b16 %v697
        %v826 = vunpack.c.l.b16 %v698
        %v827 = vunpack.c.l.b16 %v699
        %v828 = vunpack.c.l.b16 %v700
        %v829 = vunpack.c.l.b16 %v701
        %v830 = vunpack.c.l.b16 %v702
        %v831 = vunpack.c.l.b16 %v703
        %v832 = vunpack.c.l.b16 %v704
        %v833 = vunpack.c.l.b16 %v705
        %v834 = vunpack.c.l.b16 %v706
        %v835 = vunpack.c.l.b16 %v707
        %v836 = vunpack.c.l.b16 %v708
        %v837 = vpack.c.b16 %v774, %v773
        %v838 = vpack.c.b16 %v776, %v775
        %v839 = vpack.c.b16 %v778, %v777
        %v840 = vpack.c.b16 %v780, %v779
        %v841 = vpack.c.b16 %v782, %v781
        %v842 = vpack.c.b16 %v784, %v783
        %v843 = vpack.c.b16 %v786, %v785
        %v844 = vpack.c.b16 %v788, %v787
        %v845 = vpack.c.b16 %v790, %v789
        %v846 = vpack.c.b16 %v792, %v791
        %v847 = vpack.c.b16 %v794, %v793
        %v848 = vpack.c.b16 %v796, %v795
        %v849 = vpack.c.b16 %v798, %v797
        %v850 = vpack.c.b16 %v800, %v799
        %v851 = vpack.c.b16 %v802, %v801
        %v852 = vpack.c.b16 %v804, %v803
        %v853 = vpack.c.b16 %v806, %v805
        %v854 = vpack.c.b16 %v808, %v807
        %v855 = vpack.c.b16 %v810, %v809
        %v856 = vpack.c.b16 %v812, %v811
        %v857 = vpack.c.b16 %v814, %v813
        %v858 = vpack.c.b16 %v816, %v815
        %v859 = vpack.c.b16 %v818, %v817
        %v860 = vpack.c.b16 %v820, %v819
        %v861 = vpack.c.b16 %v822, %v821
        %v862 = vpack.c.b16 %v824, %v823
        %v863 = vpack.c.b16 %v826, %v825
        %v864 = vpack.c.b16 %v828, %v827
        %v865 = vpack.c.b16 %v830, %v829
        %v866 = vpack.c.b16 %v832, %v831
        %v867 = vpack.c.b16 %v834, %v833
        %v868 = vpack.c.b16 %v836, %v835
        %901 = vmatprep.subr.bf16.mxu0 0
        %902 = vmatpush1.bf16.msra.mxu0 %v837
        %903 = vmatprep.subr.bf16.mxu0 0
        %904 = vmatpush1.bf16.msra.mxu0 %v838
        %905 = vmatprep.subr.bf16.mxu0 0
        %906 = vmatpush1.bf16.msra.mxu0 %v839
        %907 = vmatprep.subr.bf16.mxu0 0
        %908 = vmatpush1.bf16.msra.mxu0 %v840
        %909 = vmatprep.subr.bf16.mxu0 0
        %910 = vmatpush1.bf16.msra.mxu0 %v841
        %911 = vmatprep.subr.bf16.mxu0 0
        %912 = vmatpush1.bf16.msra.mxu0 %v842
        %913 = vmatprep.subr.bf16.mxu0 0
        %914 = vmatpush1.bf16.msra.mxu0 %v843
        %915 = vmatprep.subr.bf16.mxu0 0
        %916 = vmatpush1.bf16.msra.mxu0 %v844
        %917 = vmatprep.subr.bf16.mxu0 0
        %918 = vmatpush1.bf16.msra.mxu0 %v845
        %919 = vmatprep.subr.bf16.mxu0 0
        %920 = vmatpush1.bf16.msra.mxu0 %v846
        %921 = vmatprep.subr.bf16.mxu0 0
        %922 = vmatpush1.bf16.msra.mxu0 %v847
        %923 = vmatprep.subr.bf16.mxu0 0
        %924 = vmatpush1.bf16.msra.mxu0 %v848
        %925 = vmatprep.subr.bf16.mxu0 0
        %926 = vmatpush1.bf16.msra.mxu0 %v849
        %927 = vmatprep.subr.bf16.mxu0 0
        %928 = vmatpush1.bf16.msra.mxu0 %v850
        %929 = vmatprep.subr.bf16.mxu0 0
        %930 = vmatpush1.bf16.msra.mxu0 %v851
        %931 = vmatprep.subr.bf16.mxu0 0
        %932 = vmatpush1.bf16.msra.mxu0 %v852
        %933 = vmatprep.mubr.bf16.mxu0 %v638
        %934 = vmatmul.mubr.bf16.gmra.mrb[0].mxu0 %v637
        %v935 = vpop.f32.mrb[0].mxu0
        %v936 = vadd.f32 0.0, %v935
        %v937 = vpop.f32.mrb[0].mxu0
        %v938 = vpop.f32.mrb[0].mxu0
        %v939 = vadd.f32 0.0, %v938
        %v940 = vpop.f32.mrb[0].mxu0
        %941 = vmatprep.mubr.bf16.mxu0 %v642
        %942 = vmatmul.mubr.bf16.gmra.mrb[0].mxu0 %v641
        %v943 = vpop.f32.mrb[0].mxu0
        %v944 = vadd.f32 0.0, %v943
        %v945 = vpop.f32.mrb[0].mxu0
        %v946 = vpop.f32.mrb[0].mxu0
        %v947 = vadd.f32 0.0, %v946
        %v948 = vpop.f32.mrb[0].mxu0
        %949 = vdwg.mxu0
        %950 = vmatprep.subr.bf16.mxu0 0
        %951 = vmatpush1.bf16.msra.mxu0 %v853
        %952 = vmatprep.subr.bf16.mxu0 0
        %953 = vmatpush1.bf16.msra.mxu0 %v854
        %954 = vmatprep.subr.bf16.mxu0 0
        %955 = vmatpush1.bf16.msra.mxu0 %v855
        %956 = vmatprep.subr.bf16.mxu0 0
        %957 = vmatpush1.bf16.msra.mxu0 %v856
        %958 = vmatprep.subr.bf16.mxu0 0
        %959 = vmatpush1.bf16.msra.mxu0 %v857
        %960 = vmatprep.subr.bf16.mxu0 0
        %961 = vmatpush1.bf16.msra.mxu0 %v858
        %962 = vmatprep.subr.bf16.mxu0 0
        %963 = vmatpush1.bf16.msra.mxu0 %v859
        %964 = vmatprep.subr.bf16.mxu0 0
        %965 = vmatpush1.bf16.msra.mxu0 %v860
        %966 = vmatprep.subr.bf16.mxu0 0
        %967 = vmatpush1.bf16.msra.mxu0 %v861
        %968 = vmatprep.subr.bf16.mxu0 0
        %969 = vmatpush1.bf16.msra.mxu0 %v862
        %970 = vmatprep.subr.bf16.mxu0 0
        %971 = vmatpush1.bf16.msra.mxu0 %v863
        %972 = vmatprep.subr.bf16.mxu0 0
        %973 = vmatpush1.bf16.msra.mxu0 %v864
        %974 = vmatprep.subr.bf16.mxu0 0
        %975 = vmatpush1.bf16.msra.mxu0 %v865
        %976 = vmatprep.subr.bf16.mxu0 0
        %977 = vmatpush1.bf16.msra.mxu0 %v866
        %978 = vmatprep.subr.bf16.mxu0 0
        %979 = vmatpush1.bf16.msra.mxu0 %v867
        %980 = vmatprep.subr.bf16.mxu0 0
        %981 = vmatpush1.bf16.msra.mxu0 %v868
        %982 = vmatprep.mubr.bf16.mxu0 %v640
        %983 = vmatmul.mubr.bf16.gmra.mrb[0].mxu0 %v639
        %v984 = vpop.f32.mrb[0].mxu0
        %v985 = vadd.f32 %v936, %v984
        %v986 = vpop.f32.mrb[0].mxu0
        %v987 = vpop.f32.mrb[0].mxu0
        %v988 = vadd.f32 %v939, %v987
        %v989 = vpop.f32.mrb[0].mxu0
        %990 = vmatprep.mubr.bf16.mxu0 %v644
        %991 = vmatmul.mubr.bf16.gmra.mrb[0].mxu0 %v643
        %v992 = vpop.f32.mrb[0].mxu0
        %v993 = vadd.f32 %v944, %v992
        %v994 = vpop.f32.mrb[0].mxu0
        %v995 = vpop.f32.mrb[0].mxu0
        %v996 = vadd.f32 %v947, %v995
        %v997 = vpop.f32.mrb[0].mxu0
        %998 = vdwg.mxu0
        %999 = vst [vmem:[%s272] sm:$0xff] %v985
        %1000 = vst [vmem:[%s272 + $0x8] sm:$0xff] %v988
        %1001 = vst [vmem:[%s272 + $0x10] sm:$0xff] %v993
        %1002 = vst [vmem:[%s272 + $0x18] sm:$0xff] %v996
        %s1003 = sand.u32 %s158, 1
        %s1004 = scalar_lea.sflag [#allocation4], %s1003
        %s1005 = sand.u32 %s158, 1
        %s1006 = smul.addr %s1005, 32
        %s1007 = scalar_lea.vmem [#allocation8], %s1006
        // Predicated region
        $region49: #{reprogramming_layer.1} parent=39 // pred_check
          %p1008 = pneg %p168
        $region50: #{reprogramming_layer.1} parent=39 // pred_check_branch
          %1010 = sbr.rel (%p1008) target = $region52
        $region51: #{reprogramming_layer.1} parent=39 // pred_region
          %s1011 = smul.u32 4, %s26
          %s1013 = ssub.s32 512, 512
          %1014 = vsyncadd %s1004, %s1013
          %s1015 = sadd.s32 %s25, %s1011
          %s1016 = smul.addr %s1015, 128
          %s1017 = scalar_lea.hbm %s5, %s1016
          %s1018 = sshll.u32 %s1007, 4
          %s1019 = int_to_ptr.vmem [resolvable:$true] %s1018
          %1024 = dma.vmem_to_hbm [thread:$0]  %s1019, 512, %s1017, %s1004, 128, 128, 8
        $region52: #{reprogramming_layer.1} parent=39 // pred_fallthru
          _
      $region40: #{reprogramming_layer.1} parent=5 // pred_fallthru
        _
      %p1025 = scmp.le.s32.totalorder 2, %s16
      // Predicated region
      $region53: #{reprogramming_layer.1} parent=5 // pred_check
        %p1026 = pneg %p1025
      $region54: #{reprogramming_layer.1} parent=5 // pred_check_branch
        %1028 = sbr.rel (%p1026) target = $region56
      $region55: #{reprogramming_layer.1} parent=5 // pred_region
        %s1029 = ssub.s32 %s16, 2
        // Predicated region
        $region57: #{reprogramming_layer.1} parent=55 // pred_check
          %p1030 = pneg %p174
        $region58: #{reprogramming_layer.1} parent=55 // pred_check_branch
          %1032 = sbr.rel (%p1030) target = $region60
        $region59: #{reprogramming_layer.1} parent=55 // pred_region
          %s1033 = sand.u32 %s159, 1
          %s1034 = scalar_lea.sflag [#allocation4], %s1033
          %s1035 = sand.u32 %s159, 1
          %s1036 = smul.addr %s1035, 32
          %s1037 = scalar_lea.vmem [#allocation8], %s1036
          %1038 = dma.done %s1034, 512
        $region60: #{reprogramming_layer.1} parent=55 // pred_fallthru
          _
      $region56: #{reprogramming_layer.1} parent=5 // pred_fallthru
        _
    $region6: #{reprogramming_layer.1} parent=1 // loop_footer
      %s20 = sadd.s32 1, %s16
    $region7: #{reprogramming_layer.1} parent=1 // loop_footer_branch
      %15 = sbr.rel target = $region3
    $region8: #{reprogramming_layer.1} parent=1 // loop_exit
      _
    %1039 = vsyncpa [#allocation4], 1
    %s1040 = scalar_lea.sflag [#allocation4], 1
    %1041 = vsyncpa %s1040, 1
    %1042 = vsyncpa [#allocation5], 1
    %s1043 = scalar_lea.sflag [#allocation5], 1
    %1044 = vsyncpa %s1043, 1
    %1045 = vsyncpa [#allocation7], 1

</llo_original>
